<compile_context>
chip_gen: v7x
topology: tpu7x:2x2x1
jax: 0.10.0
libtpu: 0.0.40
codegen_flags: <defaults>
</compile_context>

<pallas_src>
import functools

import jax
import jax.numpy as jnp
from jax import lax
from jax.experimental import pallas as pl
from jax.experimental.pallas import tpu as pltpu

_LANES = 128   # vreg lane width
_STRIP = 128   # lanes processed per inner-loop step (one vreg-wide strip)


def _round_up(a, m):
    return (a + m - 1) // m * m


def _default_compute_dtype():
    """bf16 hidden-layer math on v6e/v7x (bf16 VPU); f32 elsewhere (v5e & older)."""
    try:
        kind = jax.devices()[0].device_kind.lower()
    except Exception:
        return jnp.float32
    if "v6" in kind or "v7" in kind:
        return jnp.bfloat16
    return jnp.float32


def _dual_variable_kernel(x_ref, w1_ref, b1_ref, w2_ref, b2_ref, o_ref):
    # x_ref : (D_in, TB)       f32, batch on lanes
    # w1_ref: (D_in, Hp, 128)  compute dtype, lane-replicated linear1 weight columns
    # b1_ref: (Hp, 128)        compute dtype, lane-replicated linear1 bias
    # w2_ref: (Hp, 128)        compute dtype, lane-replicated linear2 weight (column)
    # b2_ref: (1, 1)           f32 scalar in SMEM
    # o_ref : (1, TB)          f32, lane-dense output row for this batch tile
    d_in, tb = x_ref.shape
    n_strips = tb // _STRIP                     # static (block shape is static)
    cdt = w1_ref.dtype
    b2 = b2_ref[0, 0]

    def strip_body(s, carry):
        col = pl.multiple_of(s * _STRIP, _STRIP)
        # x strip: (D_in, 128); one tiny cast to the compute dtype.
        xs = x_ref[:, pl.ds(col, _STRIP)].astype(cdt)

        # Hidden layer: D_in rank-1 VPU FMAs against lane-replicated weight
        # columns (no MXU, no lane broadcasts of params).  Params are re-read
        # from VMEM each strip on purpose: holding all five (Hp, 128) slabs in
        # vregs across the loop would overflow the 64-vreg file, and vld slots
        # have headroom relative to the binding VALU work.
        h = w1_ref[0] * xs[0:1, :]                        # (Hp, 128)
        for d in range(1, d_in):                          # d_in tiny & static
            h = h + w1_ref[d] * xs[d:d + 1, :]
        h = jnp.maximum(h + b1_ref[...], 0.0)             # padded hidden rows stay 0

        # Output layer (N = 1): VPU multiply + sublane reduction, f32 accumulation.
        o = jnp.sum(h * w2_ref[...], axis=0, keepdims=True, dtype=jnp.float32)
        o_ref[pl.ds(0, 1), pl.ds(col, _STRIP)] = (o + b2).astype(o_ref.dtype)
        return carry

    lax.fori_loop(0, n_strips, strip_body, 0, unroll=True)


@functools.partial(jax.jit,
                   static_argnames=("batch_tile", "compute_dtype", "x_transposed"))
def dual_variable_forward(x, w1, b1, w2, b2, *, batch_tile=1024,
                          compute_dtype=None, x_transposed=False):
    """Forward pass of DualVariable.

    Args (PyTorch nn.Linear layouts):
      x : (B, D_in)  — or (D_in, B) if x_transposed=True (skips a wrapper pass)
      w1: (H, D_in)   linear1.weight
      b1: (H,)        linear1.bias
      w2: (1, H)      linear2.weight
      b2: (1,)        linear2.bias
    Returns: (B, 1), same dtype as x.
    """
    if compute_dtype is None:
        compute_dtype = _default_compute_dtype()
    cdt = compute_dtype
    f32 = jnp.float32

    if x_transposed:
        d_in, B = x.shape
    else:
        B, d_in = x.shape
    H = w1.shape[0]
    Hp = _round_up(H, 8)            # hidden lives on sublanes: 8-alignment is enough

    # Adaptive batch tile: large enough to amortize the ~600-cycle per-step
    # overhead, small enough not to over-pad tiny batches, and split into >= 2
    # grid steps when possible so v7x's two TensorCores both get work.
    assert batch_tile % _LANES == 0, "batch_tile must be a multiple of 128 lanes"
    B128 = _round_up(max(B, 1), _LANES)
    TB = min(batch_tile, B128)
    if B128 >= 2 * _LANES:
        TB = min(TB, _round_up((B128 + 1) // 2, _LANES))
    B_pad = _round_up(B128, TB)
    num_tiles = B_pad // TB

    # ---- Wrapper-side layout plumbing (tiny, one fused pass each) ----
    xt = x if x_transposed else x.T
    x_t = jnp.zeros((d_in, B_pad), f32).at[:, :B].set(xt.astype(f32))

    # Zero-pad hidden H->Hp and replicate params across the 128 lanes so the
    # kernel's inner multiplies read vreg-aligned operands directly.  Padded
    # hidden rows are all-zero, so they contribute exactly 0 after ReLU * w2.
    w1c = jnp.transpose(w1.astype(cdt))[:, :, None]                    # (D_in, H, 1)
    w1l = jnp.zeros((d_in, Hp, _LANES), cdt).at[:, :H, :].set(
        jnp.broadcast_to(w1c, (d_in, H, _LANES)))
    b1l = jnp.zeros((Hp, _LANES), cdt).at[:H, :].set(
        jnp.broadcast_to(b1.astype(cdt)[:, None], (H, _LANES)))
    w2l = jnp.zeros((Hp, _LANES), cdt).at[:H, :].set(
        jnp.broadcast_to(w2.astype(cdt).reshape(H)[:, None], (H, _LANES)))
    b2_p = b2.astype(f32).reshape(1, 1)

    out = pl.pallas_call(
        _dual_variable_kernel,
        out_shape=jax.ShapeDtypeStruct((1, B_pad), f32),
        grid_spec=pltpu.PrefetchScalarGridSpec(
            num_scalar_prefetch=0,
            grid=(num_tiles,),
            in_specs=[
                pl.BlockSpec((d_in, TB), lambda i: (0, i)),             # x tile (batch on lanes)
                pl.BlockSpec((d_in, Hp, _LANES), lambda i: (0, 0, 0)),  # w1, VMEM-resident
                pl.BlockSpec((Hp, _LANES), lambda i: (0, 0)),           # b1, VMEM-resident
                pl.BlockSpec((Hp, _LANES), lambda i: (0, 0)),           # w2, VMEM-resident
                pl.BlockSpec(memory_space=pltpu.MemorySpace.SMEM),      # b2 scalar
            ],
            out_specs=pl.BlockSpec((1, TB), lambda i: (0, i)),
        ),
        compiler_params=pltpu.CompilerParams(
            dimension_semantics=("parallel",),    # batch tiles shard across TCs (v7x)
        ),
    )(x_t, w1l, b1l, w2l, b2_p)

    # (1, B_pad) lane-dense row -> (B, 1); trailing slice/reshape is tiny.
    return out[0, :B].reshape(B, 1).astype(x.dtype)


def init_params(key, input_dim=2, hidden_dim=100, dtype=jnp.float32):
    """Deterministic init mimicking nn.Linear's U(-1/sqrt(fan_in), 1/sqrt(fan_in)).

    Returned in PyTorch layouts: w1 (H, D_in), b1 (H,), w2 (1, H), b2 (1,)."""
    k1, k2, k3, k4 = jax.random.split(key, 4)
    bound1 = 1.0 / jnp.sqrt(jnp.asarray(input_dim, dtype))
    bound2 = 1.0 / jnp.sqrt(jnp.asarray(hidden_dim, dtype))
    w1 = jax.random.uniform(k1, (hidden_dim, input_dim), dtype, -bound1, bound1)
    b1 = jax.random.uniform(k2, (hidden_dim,), dtype, -bound1, bound1)
    w2 = jax.random.uniform(k3, (1, hidden_dim), dtype, -bound2, bound2)
    b2 = jax.random.uniform(k4, (1,), dtype, -bound2, bound2)
    return w1, b1, w2, b2


def reference_forward(x, w1, b1, w2, b2):
    h = jnp.maximum(x @ w1.T + b1, 0.0)
    return h @ w2.T + b2


if __name__ == "__main__":
    key = jax.random.PRNGKey(0)
    kx, kp = jax.random.split(key)

    input_dim, hidden_dim = 2, 100
    w1, b1, w2, b2 = init_params(kp, input_dim, hidden_dim)

    for batch in (8, 384):   # single-tile path and multi-tile / padded path
        x = jax.random.normal(jax.random.fold_in(kx, batch),
                              (batch, input_dim), jnp.float32)
        ref = reference_forward(x, w1, b1, w2, b2)

        # Exact-precision path (f32 everywhere) — tight check.
        out_f32 = jax.block_until_ready(
            dual_variable_forward(x, w1, b1, w2, b2, compute_dtype=jnp.float32))
        assert out_f32.shape == (batch, 1), out_f32.shape
        assert jnp.allclose(out_f32, ref, atol=1e-5, rtol=1e-5)

        # Device-default path (bf16 hidden math on v6e/v7x, f32 elsewhere).
        out_auto = jax.block_until_ready(dual_variable_forward(x, w1, b1, w2, b2))
        assert out_auto.shape == (batch, 1), out_auto.shape
        assert jnp.allclose(out_auto, ref, atol=5e-2, rtol=5e-2)

    print("KERNEL_OK")
</pallas_src>

<mosaic_0001>
module attributes {stable_mosaic.version = 11 : i64} {
  func.func @_dual_variable_kernel(%arg0: i32, %arg1: memref<2x128xf32, #tpu.memory_space<vmem>>, %arg2: memref<2x104x128xf32, #tpu.memory_space<vmem>>, %arg3: memref<104x128xf32, #tpu.memory_space<vmem>>, %arg4: memref<104x128xf32, #tpu.memory_space<vmem>>, %arg5: memref<1x1xf32, #tpu.memory_space<smem>>, %arg6: memref<1x128xf32, #tpu.memory_space<vmem>>) attributes {dimension_semantics = [#tpu.dimension_semantics<parallel>], iteration_bounds = array<i64: 1>, scalar_prefetch = 0 : i64, scratch_operands = 0 : i64, tpu.core_type = #tpu.core_type<tc>, window_params = [{transform_indices = @transform_0, window_bounds = array<i64: 2, 128>}, {pipeline_mode = #tpu.pipeline_mode<synchronous>, transform_indices = @transform_1, window_bounds = array<i64: 2, 104, 128>}, {pipeline_mode = #tpu.pipeline_mode<synchronous>, transform_indices = @transform_2, window_bounds = array<i64: 104, 128>}, {pipeline_mode = #tpu.pipeline_mode<synchronous>, transform_indices = @transform_3, window_bounds = array<i64: 104, 128>}, {transform_indices = @transform_4, window_bounds = array<i64: 1, 1>}, {transform_indices = @transform_5, window_bounds = array<i64: 1, 128>}]} {
    %c0 = arith.constant 0 : index
    %c0_0 = arith.constant 0 : index
    %0 = memref.load %arg5[%c0, %c0_0] : memref<1x1xf32, #tpu.memory_space<smem>>
    %c0_i32 = arith.constant 0 : i32
    %c128_i32 = arith.constant 128 : i32
    %1 = arith.muli %c0_i32, %c128_i32 : i32
    %2 = tpu.assume_multiple %1, 128 : i32
    %c0_1 = arith.constant 0 : index
    %3 = arith.index_cast %2 : i32 to index
    %4 = vector.load %arg1[%c0_1, %3] : memref<2x128xf32, #tpu.memory_space<vmem>>, vector<2x128xf32>
    %c0_2 = arith.constant 0 : index
    %c0_3 = arith.constant 0 : index
    %c0_4 = arith.constant 0 : index
    %5 = vector.load %arg2[%c0_2, %c0_3, %c0_4] : memref<2x104x128xf32, #tpu.memory_space<vmem>>, vector<1x104x128xf32>
    %6 = vector.shape_cast %5 : vector<1x104x128xf32> to vector<104x128xf32>
    %7 = vector.extract_strided_slice %4 {offsets = [0, 0], sizes = [1, 128], strides = [1, 1]} : vector<2x128xf32> to vector<1x128xf32>
    %8 = vector.broadcast %7 : vector<1x128xf32> to vector<104x128xf32>
    %9 = arith.mulf %6, %8 : vector<104x128xf32>
    %c1 = arith.constant 1 : index
    %c0_5 = arith.constant 0 : index
    %c0_6 = arith.constant 0 : index
    %10 = vector.load %arg2[%c1, %c0_5, %c0_6] : memref<2x104x128xf32, #tpu.memory_space<vmem>>, vector<1x104x128xf32>
    %11 = vector.shape_cast %10 : vector<1x104x128xf32> to vector<104x128xf32>
    %12 = vector.extract_strided_slice %4 {offsets = [1, 0], sizes = [1, 128], strides = [1, 1]} : vector<2x128xf32> to vector<1x128xf32>
    %13 = vector.broadcast %12 : vector<1x128xf32> to vector<104x128xf32>
    %14 = arith.mulf %11, %13 : vector<104x128xf32>
    %15 = arith.addf %9, %14 : vector<104x128xf32>
    %c0_7 = arith.constant 0 : index
    %c0_8 = arith.constant 0 : index
    %16 = vector.load %arg3[%c0_7, %c0_8] : memref<104x128xf32, #tpu.memory_space<vmem>>, vector<104x128xf32>
    %17 = arith.addf %15, %16 : vector<104x128xf32>
    %cst = arith.constant 0.000000e+00 : f32
    %18 = vector.broadcast %cst : f32 to vector<104x128xf32>
    %19 = arith.maximumf %17, %18 : vector<104x128xf32>
    %c0_9 = arith.constant 0 : index
    %c0_10 = arith.constant 0 : index
    %20 = vector.load %arg4[%c0_9, %c0_10] : memref<104x128xf32, #tpu.memory_space<vmem>>, vector<104x128xf32>
    %21 = arith.mulf %19, %20 : vector<104x128xf32>
    %cst_11 = arith.constant dense<0.000000e+00> : vector<128xf32>
    %22 = vector.multi_reduction <add>, %21, %cst_11 [0] : vector<104x128xf32> to vector<128xf32>
    %23 = vector.shape_cast %22 : vector<128xf32> to vector<1x128xf32>
    %24 = vector.broadcast %0 : f32 to vector<1x128xf32>
    %25 = arith.addf %23, %24 : vector<1x128xf32>
    %c0_12 = arith.constant 0 : index
    %26 = arith.index_cast %2 : i32 to index
    %27 = vector.load %arg6[%c0_12, %26] : memref<1x128xf32, #tpu.memory_space<vmem>>, vector<1x128xf32>
    tpu.vector_store %arg6[%c0_12, %26], %25 {strides = array<i32>} : memref<1x128xf32, #tpu.memory_space<vmem>>, vector<1x128xf32>,
    %c1_i32 = arith.constant 1 : i32
    return
  }
  func.func @transform_0(%arg0: i32) -> (i32, i32) {
    %c0_i32 = arith.constant 0 : i32
    %c0_i32_0 = arith.constant 0 : i32
    return %c0_i32, %arg0 : i32, i32
  }
  func.func @transform_1(%arg0: i32) -> (i32, i32, i32) {
    %c0_i32 = arith.constant 0 : i32
    %c0_i32_0 = arith.constant 0 : i32
    %c0_i32_1 = arith.constant 0 : i32
    %c0_i32_2 = arith.constant 0 : i32
    return %c0_i32, %c0_i32_0, %c0_i32_1 : i32, i32, i32
  }
  func.func @transform_2(%arg0: i32) -> (i32, i32) {
    %c0_i32 = arith.constant 0 : i32
    %c0_i32_0 = arith.constant 0 : i32
    %c0_i32_1 = arith.constant 0 : i32
    return %c0_i32, %c0_i32_0 : i32, i32
  }
  func.func @transform_3(%arg0: i32) -> (i32, i32) {
    %c0_i32 = arith.constant 0 : i32
    %c0_i32_0 = arith.constant 0 : i32
    %c0_i32_1 = arith.constant 0 : i32
    return %c0_i32, %c0_i32_0 : i32, i32
  }
  func.func @transform_4(%arg0: i32) -> (i32, i32) {
    %c0_i32 = arith.constant 0 : i32
    %c0_i32_0 = arith.constant 0 : i32
    %c0_i32_1 = arith.constant 0 : i32
    return %c0_i32, %c0_i32_0 : i32, i32
  }
  func.func @transform_5(%arg0: i32) -> (i32, i32) {
    %c0_i32 = arith.constant 0 : i32
    %c0_i32_0 = arith.constant 0 : i32
    return %c0_i32, %arg0 : i32, i32
  }
}

</mosaic_0001>

<llo_original>
// kernel: dual_variable_forward.1
$region0: #{dual_variable_forward.1}
  #allocation0 [shape = 'u32[]', space=smem, size = 0x4, offset = 0x4, fixed_abs, tag = 'smem constant byte address 0x4 - core index']
  #allocation1 [shape = 'u32[144,128]{1,0:T(1,128)}', space=vmem, size = 0x12000, scoped, tag = 'internal scratch']
  #allocation2 [shape = 'f32[1,1]{1,0:T(1,128)S(6)}', space=smem, size = 0x200, scoped, tag = 'scoped memory for dual_variable_forward.1']
  %s0 = inlined_call_operand.vmem [shape: f32[2,128], index: 0, kind: input, shape index: {}]
  %s1 = inlined_call_operand.vmem [shape: f32[2,104,128], index: 1, kind: input, shape index: {}]
  %s2 = inlined_call_operand.vmem [shape: f32[104,128], index: 2, kind: input, shape index: {}]
  %s3 = inlined_call_operand.vmem [shape: f32[104,128], index: 3, kind: input, shape index: {}]
  %s4 = inlined_call_operand.<no memory space> [shape: f32[1,1], index: 4, kind: input, shape index: {}]
  %s5 = inlined_call_operand.vmem [shape: f32[1,128], index: 5, kind: output, shape index: {}]
  %s6 = sld [smem:[#allocation0]]
  $region30: #{dual_variable_forward.1} parent=0
    _
  %s8 = ssub.s32 1, %s6
  %s9 = scalar_select 0, %s8, %s6
  %10 = sst [smem:[#allocation2]] %s4
  // Predicated region
  $region2: #{dual_variable_forward.1} parent=0 // pred_check
    _
  $region3: #{dual_variable_forward.1} parent=0 // pred_check_branch
    %12 = sbr.rel (0) target = $region5
  $region4: #{dual_variable_forward.1} parent=0 // pred_region
    _
  $region5: #{dual_variable_forward.1} parent=0 // pred_fallthru
    _
  // Predicated region
  $region6: #{dual_variable_forward.1} parent=0 // pred_check
    _
  $region7: #{dual_variable_forward.1} parent=0 // pred_check_branch
    %14 = sbr.rel (0) target = $region9
  $region8: #{dual_variable_forward.1} parent=0 // pred_region
    _
  $region9: #{dual_variable_forward.1} parent=0 // pred_fallthru
    _
  // Predicated region
  $region10: #{dual_variable_forward.1} parent=0 // pred_check
    _
  $region11: #{dual_variable_forward.1} parent=0 // pred_check_branch
    %16 = sbr.rel (0) target = $region13
  $region12: #{dual_variable_forward.1} parent=0 // pred_region
    _
  $region13: #{dual_variable_forward.1} parent=0 // pred_fallthru
    _
  // Predicated region
  $region14: #{dual_variable_forward.1} parent=0 // pred_check
    _
  $region15: #{dual_variable_forward.1} parent=0 // pred_check_branch
    %18 = sbr.rel (0) target = $region17
  $region16: #{dual_variable_forward.1} parent=0 // pred_region
    _
  $region17: #{dual_variable_forward.1} parent=0 // pred_fallthru
    _
  // Predicated region
  $region18: #{dual_variable_forward.1} parent=0 // pred_check
    _
  $region19: #{dual_variable_forward.1} parent=0 // pred_check_branch
    %20 = sbr.rel (0) target = $region21
  $region20: #{dual_variable_forward.1} parent=0 // pred_region
    _
  $region21: #{dual_variable_forward.1} parent=0 // pred_fallthru
    _
  %s21 = sld [smem:[#allocation2]]
  %v22 = vld [vmem:[%s0] sm:$0x3]
  %v23 = vld [vmem:[%s1] sm:$0xff]
  %v24 = vld [vmem:[%s1 + $0x8] sm:$0xff]
  %v25 = vld [vmem:[%s1 + $0x10] sm:$0xff]
  %v26 = vld [vmem:[%s1 + $0x18] sm:$0xff]
  %v27 = vld [vmem:[%s1 + $0x20] sm:$0xff]
  %v28 = vld [vmem:[%s1 + $0x28] sm:$0xff]
  %v29 = vld [vmem:[%s1 + $0x30] sm:$0xff]
  %v30 = vld [vmem:[%s1 + $0x38] sm:$0xff]
  %v31 = vld [vmem:[%s1 + $0x40] sm:$0xff]
  %v32 = vld [vmem:[%s1 + $0x48] sm:$0xff]
  %v33 = vld [vmem:[%s1 + $0x50] sm:$0xff]
  %v34 = vld [vmem:[%s1 + $0x58] sm:$0xff]
  %v35 = vld [vmem:[%s1 + $0x60] sm:$0xff]
  %v36 = vlaneseq
  %v37 = vshrl.u32 %v36, 7
  %v38 = vsub.s32 0, %v37
  %v39 = vrot.slane %v22, %v38
  %v40 = vmul.f32 %v23, %v39
  %v41 = vmul.f32 %v24, %v39
  %v42 = vmul.f32 %v25, %v39
  %v43 = vmul.f32 %v26, %v39
  %v44 = vmul.f32 %v27, %v39
  %v45 = vmul.f32 %v28, %v39
  %v46 = vmul.f32 %v29, %v39
  %v47 = vmul.f32 %v30, %v39
  %v48 = vmul.f32 %v31, %v39
  %v49 = vmul.f32 %v32, %v39
  %v50 = vmul.f32 %v33, %v39
  %v51 = vmul.f32 %v34, %v39
  %v52 = vmul.f32 %v35, %v39
  %s53 = scalar_lea.vmem %s1, 104
  %v54 = vld [vmem:[%s53] sm:$0xff]
  %v55 = vld [vmem:[%s53 + $0x8] sm:$0xff]
  %v56 = vld [vmem:[%s53 + $0x10] sm:$0xff]
  %v57 = vld [vmem:[%s53 + $0x18] sm:$0xff]
  %v58 = vld [vmem:[%s53 + $0x20] sm:$0xff]
  %v59 = vld [vmem:[%s53 + $0x28] sm:$0xff]
  %v60 = vld [vmem:[%s53 + $0x30] sm:$0xff]
  %v61 = vld [vmem:[%s53 + $0x38] sm:$0xff]
  %v62 = vld [vmem:[%s53 + $0x40] sm:$0xff]
  %v63 = vld [vmem:[%s53 + $0x48] sm:$0xff]
  %v64 = vld [vmem:[%s53 + $0x50] sm:$0xff]
  %v65 = vld [vmem:[%s53 + $0x58] sm:$0xff]
  %v66 = vld [vmem:[%s53 + $0x60] sm:$0xff]
  %v67 = vlaneseq
  %v68 = vshrl.u32 %v67, 7
  %v69 = vsub.s32 1, %v68
  %v70 = vrot.slane %v22, %v69
  %v71 = vmul.f32 %v54, %v70
  %v72 = vmul.f32 %v55, %v70
  %v73 = vmul.f32 %v56, %v70
  %v74 = vmul.f32 %v57, %v70
  %v75 = vmul.f32 %v58, %v70
  %v76 = vmul.f32 %v59, %v70
  %v77 = vmul.f32 %v60, %v70
  %v78 = vmul.f32 %v61, %v70
  %v79 = vmul.f32 %v62, %v70
  %v80 = vmul.f32 %v63, %v70
  %v81 = vmul.f32 %v64, %v70
  %v82 = vmul.f32 %v65, %v70
  %v83 = vmul.f32 %v66, %v70
  %v84 = vadd.f32 %v40, %v71
  %v85 = vadd.f32 %v41, %v72
  %v86 = vadd.f32 %v42, %v73
  %v87 = vadd.f32 %v43, %v74
  %v88 = vadd.f32 %v44, %v75
  %v89 = vadd.f32 %v45, %v76
  %v90 = vadd.f32 %v46, %v77
  %v91 = vadd.f32 %v47, %v78
  %v92 = vadd.f32 %v48, %v79
  %v93 = vadd.f32 %v49, %v80
  %v94 = vadd.f32 %v50, %v81
  %v95 = vadd.f32 %v51, %v82
  %v96 = vadd.f32 %v52, %v83
  %v97 = vld [vmem:[%s2] sm:$0xff]
  %v98 = vld [vmem:[%s2 + $0x8] sm:$0xff]
  %v99 = vld [vmem:[%s2 + $0x10] sm:$0xff]
  %v100 = vld [vmem:[%s2 + $0x18] sm:$0xff]
  %v101 = vld [vmem:[%s2 + $0x20] sm:$0xff]
  %v102 = vld [vmem:[%s2 + $0x28] sm:$0xff]
  %v103 = vld [vmem:[%s2 + $0x30] sm:$0xff]
  %v104 = vld [vmem:[%s2 + $0x38] sm:$0xff]
  %v105 = vld [vmem:[%s2 + $0x40] sm:$0xff]
  %v106 = vld [vmem:[%s2 + $0x48] sm:$0xff]
  %v107 = vld [vmem:[%s2 + $0x50] sm:$0xff]
  %v108 = vld [vmem:[%s2 + $0x58] sm:$0xff]
  %v109 = vld [vmem:[%s2 + $0x60] sm:$0xff]
  %v110 = vadd.f32 %v84, %v97
  %v111 = vadd.f32 %v85, %v98
  %v112 = vadd.f32 %v86, %v99
  %v113 = vadd.f32 %v87, %v100
  %v114 = vadd.f32 %v88, %v101
  %v115 = vadd.f32 %v89, %v102
  %v116 = vadd.f32 %v90, %v103
  %v117 = vadd.f32 %v91, %v104
  %v118 = vadd.f32 %v92, %v105
  %v119 = vadd.f32 %v93, %v106
  %v120 = vadd.f32 %v94, %v107
  %v121 = vadd.f32 %v95, %v108
  %v122 = vadd.f32 %v96, %v109
  %v123 = vmax.f32 %v110, 0.0
  %v124 = vmax.f32 %v111, 0.0
  %v125 = vmax.f32 %v112, 0.0
  %v126 = vmax.f32 %v113, 0.0
  %v127 = vmax.f32 %v114, 0.0
  %v128 = vmax.f32 %v115, 0.0
  %v129 = vmax.f32 %v116, 0.0
  %v130 = vmax.f32 %v117, 0.0
  %v131 = vmax.f32 %v118, 0.0
  %v132 = vmax.f32 %v119, 0.0
  %v133 = vmax.f32 %v120, 0.0
  %v134 = vmax.f32 %v121, 0.0
  %v135 = vmax.f32 %v122, 0.0
  %v136 = vld [vmem:[%s3] sm:$0xff]
  %v137 = vld [vmem:[%s3 + $0x8] sm:$0xff]
  %v138 = vld [vmem:[%s3 + $0x10] sm:$0xff]
  %v139 = vld [vmem:[%s3 + $0x18] sm:$0xff]
  %v140 = vld [vmem:[%s3 + $0x20] sm:$0xff]
  %v141 = vld [vmem:[%s3 + $0x28] sm:$0xff]
  %v142 = vld [vmem:[%s3 + $0x30] sm:$0xff]
  %v143 = vld [vmem:[%s3 + $0x38] sm:$0xff]
  %v144 = vld [vmem:[%s3 + $0x40] sm:$0xff]
  %v145 = vld [vmem:[%s3 + $0x48] sm:$0xff]
  %v146 = vld [vmem:[%s3 + $0x50] sm:$0xff]
  %v147 = vld [vmem:[%s3 + $0x58] sm:$0xff]
  %v148 = vld [vmem:[%s3 + $0x60] sm:$0xff]
  %v149 = vmul.f32 %v123, %v136
  %v150 = vmul.f32 %v124, %v137
  %v151 = vmul.f32 %v125, %v138
  %v152 = vmul.f32 %v126, %v139
  %v153 = vmul.f32 %v127, %v140
  %v154 = vmul.f32 %v128, %v141
  %v155 = vmul.f32 %v129, %v142
  %v156 = vmul.f32 %v130, %v143
  %v157 = vmul.f32 %v131, %v144
  %v158 = vmul.f32 %v132, %v145
  %v159 = vmul.f32 %v133, %v146
  %v160 = vmul.f32 %v134, %v147
  %v161 = vmul.f32 %v135, %v148
  %v162 = vadd.f32 %v149, %v150
  %v163 = vadd.f32 %v162, %v151
  %v164 = vadd.f32 %v163, %v152
  %v165 = vadd.f32 %v164, %v153
  %v166 = vadd.f32 %v165, %v154
  %v167 = vadd.f32 %v166, %v155
  %v168 = vadd.f32 %v167, %v156
  %v169 = vadd.f32 %v168, %v157
  %v170 = vadd.f32 %v169, %v158
  %v171 = vadd.f32 %v170, %v159
  %v172 = vadd.f32 %v171, %v160
  %v173 = vadd.f32 %v172, %v161
  %v174 = vrot.slane %v173, 4
  %v175 = vadd.f32 %v173, %v174
  %v176 = vrot.slane %v175, 2
  %v177 = vadd.f32 %v175, %v176
  %v178 = vrot.slane %v177, 1
  %v179 = vadd.f32 %v177, %v178
  %v180 = vstv %s21
  %v181 = vadd.f32 %v179, %v180
  %182 = vst [vmem:[%s5] sm:$0x1] %v181
  // Predicated region
  $region22: #{dual_variable_forward.1} parent=0 // pred_check
    _
  $region23: #{dual_variable_forward.1} parent=0 // pred_check_branch
    %184 = sbr.rel (0) target = $region25
  $region24: #{dual_variable_forward.1} parent=0 // pred_region
    _
  $region25: #{dual_variable_forward.1} parent=0 // pred_fallthru
    _
  // Predicated region
  $region26: #{dual_variable_forward.1} parent=0 // pred_check
    _
  $region27: #{dual_variable_forward.1} parent=0 // pred_check_branch
    %186 = sbr.rel (0) target = $region29
  $region28: #{dual_variable_forward.1} parent=0 // pred_region
    _
  $region29: #{dual_variable_forward.1} parent=0 // pred_fallthru
    _

</llo_original>
